<compile_context>
chip_gen: v7x
topology: tpu7x:2x2x1
jax: 0.10.0
libtpu: 0.0.40
codegen_flags: <defaults>
</compile_context>

<pallas_src>
import functools

import jax
import jax.numpy as jnp
from jax.experimental import pallas as pl
from jax.experimental.pallas import tpu as pltpu


_OUT_W = 8  # narrow output width: lane 0 = q1, lane 1 = q2, lanes 2..7 unused


def _round_up(x, m):
    return ((x + m - 1) // m) * m


def _choose_tiles(B, block_batch):
    """Balanced batch tiles: multiple of 8, minimal padding, >=2 tiles when
    B >= 256 so both v7x TensorCores participate."""
    block_batch = max(8, _round_up(block_batch, 8))
    n_tiles = -(-B // block_batch)
    if B >= 256:
        n_tiles = max(n_tiles, 2)
    tb = _round_up(-(-B // n_tiles), 8)
    b_pad = n_tiles * tb
    return tb, b_pad, n_tiles


# --------------------------------------------------------------------------
# Kernel: one batch tile of the fused twin-head critic (3 matmuls, 2 relus)
# --------------------------------------------------------------------------
def _sac_critic_fused_kernel(x_ref, w1_ref, w2_ref, b2_ref, w3_ref, b3_ref,
                             out_ref):
    mm_dtype = w1_ref.dtype  # bf16 (default) or f32; weights pre-cast in wrapper

    # Layer 1 (fc1 || fc4): single K=(in_dim+1) matmul, bias folded into W via
    # the ones column of x.
    x = x_ref[...].astype(mm_dtype)
    h = jnp.dot(x, w1_ref[...], preferred_element_type=jnp.float32)
    h = jnp.maximum(h, 0.0)

    # Layer 2 (block-diagonal fc2 (+) fc5), f32 bias + relu.
    h = jnp.dot(h.astype(mm_dtype), w2_ref[...],
                preferred_element_type=jnp.float32) + b2_ref[...]
    h = jnp.maximum(h, 0.0)

    # Layer 3 (fc3 (+) fc6) into the narrow 8-lane output (q1 -> lane 0,
    # q2 -> lane 1).  Last block dim equals the full array dim, so it is legal
    # and keeps HBM writeback 16x smaller than a 128-wide slab.
    out = jnp.dot(h.astype(mm_dtype), w3_ref[...],
                  preferred_element_type=jnp.float32) + b3_ref[...]
    out_ref[...] = out.astype(out_ref.dtype)


# --------------------------------------------------------------------------
# Wrapper
# --------------------------------------------------------------------------
@functools.partial(jax.jit, static_argnames=("block_batch",))
def sac_critic_forward(s, a, packed_params, *, block_batch=1024):
    """s: [B, state_dim], a: [B, action_dim] (f32). Returns (q1, q2), each [B, 1]."""
    w1f, w2f, b2f, w3f, b3f = packed_params
    B = s.shape[0]
    in_aug = w1f.shape[0]                 # state_dim + action_dim + 1
    h1x2 = w1f.shape[1]                   # 256
    h1, h2 = h1x2 // 2, w2f.shape[1] // 2  # 128, 64

    # Merged activation [s | a | 1]: one layer-1 matmul, bias folded into w1f.
    x = jnp.concatenate([s, a, jnp.ones((B, 1), s.dtype)], axis=1)

    tb, b_pad, n_tiles = _choose_tiles(B, block_batch)
    if b_pad != B:
        x = jnp.pad(x, ((0, b_pad - B), (0, 0)))

    def const_spec(arr):
        # Same block every grid step -> weights/biases stay VMEM-resident.
        return pl.BlockSpec(arr.shape, lambda i: (0, 0))

    # Count only real (non-zero-padded) work; advisory scheduling hint.
    flops = 2 * B * (in_aug * h1x2 + 2 * h1 * h2 + 2 * h2 * 1)
    bytes_accessed = (x.size * x.dtype.itemsize
                      + sum(p.size * p.dtype.itemsize for p in packed_params)
                      + B * _OUT_W * 4)

    out = pl.pallas_call(
        _sac_critic_fused_kernel,
        out_shape=jax.ShapeDtypeStruct((b_pad, _OUT_W), jnp.float32),
        grid=(n_tiles,),
        in_specs=[
            pl.BlockSpec((tb, in_aug), lambda i: (i, 0)),
            const_spec(w1f), const_spec(w2f), const_spec(b2f),
            const_spec(w3f), const_spec(b3f),
        ],
        out_specs=pl.BlockSpec((tb, _OUT_W), lambda i: (i, 0)),
        compiler_params=pltpu.CompilerParams(
            dimension_semantics=("parallel",)),
        cost_estimate=pl.CostEstimate(
            flops=flops, transcendentals=0, bytes_accessed=bytes_accessed),
    )(x, w1f, w2f, b2f, w3f, b3f)

    q12 = out[:B, :2]          # slice the (q1, q2) pair once from the narrow output
    return q12[:, 0:1], q12[:, 1:2]


# --------------------------------------------------------------------------
# Parameter construction / packing
# --------------------------------------------------------------------------
def init_sac_critic_params(key, state_dim=3, action_dim=1):
    """Orthogonal init (gain=1.0), zero biases — mirrors orthogonal_init_all().
    Weights stored as [in, out] (transpose of PyTorch nn.Linear)."""
    in_dim = state_dim + action_dim
    dims = [(in_dim, 128), (128, 64), (64, 1),     # fc1, fc2, fc3
            (in_dim, 128), (128, 64), (64, 1)]     # fc4, fc5, fc6
    orth = jax.nn.initializers.orthogonal(scale=1.0)
    keys = jax.random.split(key, len(dims))
    params = []
    for k, (din, dout) in zip(keys, dims):
        w = orth(k, (dout, din), jnp.float32).T    # generated as (out,in), stored (in,out)
        b = jnp.zeros((1, dout), jnp.float32)
        params += [w, b]
    return tuple(params)


def pack_sac_critic_params(params, matmul_dtype=jnp.bfloat16):
    """Pack the 6 linear layers into the fused 3-layer form used by the kernel.
    bf16 operands (default) use the native single-pass MXU path with f32
    accumulation; pass matmul_dtype=jnp.float32 for bit-tight debugging."""
    (w1, b1, w2, b2, w3, b3, w4, b4, w5, b5, w6, b6) = params
    h1 = w1.shape[1]   # 128
    h2 = w2.shape[1]   # 64

    # Layer 1: [in_dim+1, 2*h1]; last row is the fused bias (ones-column fold).
    w1f = jnp.concatenate(
        [jnp.concatenate([w1, w4], axis=1),
         jnp.concatenate([b1, b4], axis=1)], axis=0).astype(matmul_dtype)

    # Layer 2: block-diagonal [2*h1, 2*h2].
    w2f = jnp.zeros((2 * h1, 2 * h2), jnp.float32)
    w2f = w2f.at[:h1, :h2].set(w2).at[h1:, h2:].set(w5)
    b2f = jnp.concatenate([b2, b5], axis=1).astype(jnp.float32)   # [1, 128]

    # Layer 3: [2*h2, 8]; q1 -> lane 0, q2 -> lane 1.
    w3f = jnp.zeros((2 * h2, _OUT_W), jnp.float32)
    w3f = w3f.at[:h2, 0:1].set(w3).at[h2:, 1:2].set(w6)
    b3f = jnp.zeros((1, _OUT_W), jnp.float32)
    b3f = b3f.at[0, 0].set(b3[0, 0]).at[0, 1].set(b6[0, 0])

    return (w1f, w2f.astype(matmul_dtype), b2f, w3f.astype(matmul_dtype), b3f)


# --------------------------------------------------------------------------
# Pure-JAX reference (matches the PyTorch forward)
# --------------------------------------------------------------------------
def _reference_forward(s, a, params):
    (w1, b1, w2, b2, w3, b3, w4, b4, w5, b5, w6, b6) = params
    sa = jnp.concatenate([s, a], axis=1)
    h = jnp.maximum(sa @ w1 + b1, 0.0)
    h = jnp.maximum(h @ w2 + b2, 0.0)
    q1 = h @ w3 + b3
    g = jnp.maximum(sa @ w4 + b4, 0.0)
    g = jnp.maximum(g @ w5 + b5, 0.0)
    q2 = g @ w6 + b6
    return q1, q2


if __name__ == "__main__":
    key = jax.random.PRNGKey(0)
    k_params, k_s, k_a, k_s2, k_a2 = jax.random.split(key, 5)

    state_dim, action_dim = 3, 1
    raw_params = init_sac_critic_params(k_params, state_dim, action_dim)

    # ---- small "acting" batch, f32 matmul operands: tight tolerance ----
    B = 8
    s = jax.random.normal(k_s, (B, state_dim), jnp.float32)
    a = jax.random.normal(k_a, (B, action_dim), jnp.float32)
    packed_f32 = pack_sac_critic_params(raw_params, matmul_dtype=jnp.float32)
    q1, q2 = sac_critic_forward(s, a, packed_f32)
    jax.block_until_ready((q1, q2))
    q1_ref, q2_ref = _reference_forward(s, a, raw_params)
    assert q1.shape == (B, 1) and q2.shape == (B, 1)
    assert jnp.allclose(q1, q1_ref, atol=1e-5), "q1 mismatch (f32 path)"
    assert jnp.allclose(q2, q2_ref, atol=1e-5), "q2 mismatch (f32 path)"

    # ---- training-size batch, bf16 operands + f32 accumulation.
    #      B=600 with default block_batch forces >=2 balanced tiles
    #      (tb=304, b_pad=608): exercises multi-tile grid + batch padding. ----
    B2 = 600
    s2 = jax.random.normal(k_s2, (B2, state_dim), jnp.float32)
    a2 = jax.random.normal(k_a2, (B2, action_dim), jnp.float32)
    packed_bf16 = pack_sac_critic_params(raw_params)   # bf16 default
    q1b, q2b = sac_critic_forward(s2, a2, packed_bf16)
    jax.block_until_ready((q1b, q2b))
    q1b_ref, q2b_ref = _reference_forward(s2, a2, raw_params)
    assert q1b.shape == (B2, 1) and q2b.shape == (B2, 1)
    assert jnp.allclose(q1b, q1b_ref, atol=5e-2, rtol=5e-2), "q1 mismatch (bf16 path)"
    assert jnp.allclose(q2b, q2b_ref, atol=5e-2, rtol=5e-2), "q2 mismatch (bf16 path)"

    print("KERNEL_OK")
</pallas_src>

<mosaic_0001>
module attributes {stable_mosaic.version = 11 : i64} {
  func.func @_sac_critic_fused_kernel(%arg0: i32, %arg1: memref<8x5xf32, #tpu.memory_space<vmem>>, %arg2: memref<5x256xf32, #tpu.memory_space<vmem>>, %arg3: memref<256x128xf32, #tpu.memory_space<vmem>>, %arg4: memref<1x128xf32, #tpu.memory_space<vmem>>, %arg5: memref<128x8xf32, #tpu.memory_space<vmem>>, %arg6: memref<1x8xf32, #tpu.memory_space<vmem>>, %arg7: memref<8x8xf32, #tpu.memory_space<vmem>>) attributes {dimension_semantics = [#tpu.dimension_semantics<parallel>], iteration_bounds = array<i64: 1>, scalar_prefetch = 0 : i64, scratch_operands = 0 : i64, tpu.core_type = #tpu.core_type<tc>, window_params = [{transform_indices = @transform_0, window_bounds = array<i64: 8, 5>}, {pipeline_mode = #tpu.pipeline_mode<synchronous>, transform_indices = @transform_1, window_bounds = array<i64: 5, 256>}, {pipeline_mode = #tpu.pipeline_mode<synchronous>, transform_indices = @transform_2, window_bounds = array<i64: 256, 128>}, {pipeline_mode = #tpu.pipeline_mode<synchronous>, transform_indices = @transform_3, window_bounds = array<i64: 1, 128>}, {pipeline_mode = #tpu.pipeline_mode<synchronous>, transform_indices = @transform_4, window_bounds = array<i64: 128, 8>}, {pipeline_mode = #tpu.pipeline_mode<synchronous>, transform_indices = @transform_5, window_bounds = array<i64: 1, 8>}, {transform_indices = @transform_6, window_bounds = array<i64: 8, 8>}]} {
    %c0 = arith.constant 0 : index
    %c0_0 = arith.constant 0 : index
    %0 = vector.load %arg1[%c0, %c0_0] : memref<8x5xf32, #tpu.memory_space<vmem>>, vector<8x5xf32>
    %c0_1 = arith.constant 0 : index
    %c0_2 = arith.constant 0 : index
    %1 = vector.load %arg2[%c0_1, %c0_2] : memref<5x256xf32, #tpu.memory_space<vmem>>, vector<5x256xf32>
    %cst = arith.constant dense<0.000000e+00> : vector<8x256xf32>
    %2 = tpu.matmul %0, %1, %cst {dimension_numbers = #tpu.dot_dimension_numbers<[1], [0], [0], [1], [0, 0, 1, 1], [], []>} : vector<8x5xf32>, vector<5x256xf32>, vector<8x256xf32> -> vector<8x256xf32>
    %cst_3 = arith.constant 0.000000e+00 : f32
    %3 = vector.broadcast %cst_3 : f32 to vector<8x256xf32>
    %4 = arith.maximumf %2, %3 : vector<8x256xf32>
    %c0_4 = arith.constant 0 : index
    %c0_5 = arith.constant 0 : index
    %5 = vector.load %arg3[%c0_4, %c0_5] : memref<256x128xf32, #tpu.memory_space<vmem>>, vector<256x128xf32>
    %cst_6 = arith.constant dense<0.000000e+00> : vector<8x128xf32>
    %6 = tpu.matmul %4, %5, %cst_6 {dimension_numbers = #tpu.dot_dimension_numbers<[1], [0], [0], [1], [0, 0, 1, 1], [], []>} : vector<8x256xf32>, vector<256x128xf32>, vector<8x128xf32> -> vector<8x128xf32>
    %c0_7 = arith.constant 0 : index
    %c0_8 = arith.constant 0 : index
    %7 = vector.load %arg4[%c0_7, %c0_8] : memref<1x128xf32, #tpu.memory_space<vmem>>, vector<1x128xf32>
    %8 = vector.broadcast %7 : vector<1x128xf32> to vector<8x128xf32>
    %9 = arith.addf %6, %8 : vector<8x128xf32>
    %cst_9 = arith.constant 0.000000e+00 : f32
    %10 = vector.broadcast %cst_9 : f32 to vector<8x128xf32>
    %11 = arith.maximumf %9, %10 : vector<8x128xf32>
    %c0_10 = arith.constant 0 : index
    %c0_11 = arith.constant 0 : index
    %12 = vector.load %arg5[%c0_10, %c0_11] : memref<128x8xf32, #tpu.memory_space<vmem>>, vector<128x8xf32>
    %cst_12 = arith.constant dense<0.000000e+00> : vector<8x8xf32>
    %13 = tpu.matmul %11, %12, %cst_12 {dimension_numbers = #tpu.dot_dimension_numbers<[1], [0], [0], [1], [0, 0, 1, 1], [], []>} : vector<8x128xf32>, vector<128x8xf32>, vector<8x8xf32> -> vector<8x8xf32>
    %c0_13 = arith.constant 0 : index
    %c0_14 = arith.constant 0 : index
    %14 = vector.load %arg6[%c0_13, %c0_14] : memref<1x8xf32, #tpu.memory_space<vmem>>, vector<1x8xf32>
    %15 = vector.broadcast %14 : vector<1x8xf32> to vector<8x8xf32>
    %16 = arith.addf %13, %15 : vector<8x8xf32>
    %c0_15 = arith.constant 0 : index
    %c0_16 = arith.constant 0 : index
    %17 = vector.load %arg7[%c0_15, %c0_16] : memref<8x8xf32, #tpu.memory_space<vmem>>, vector<8x8xf32>
    tpu.vector_store %arg7[%c0_15, %c0_16], %16 {strides = array<i32>} : memref<8x8xf32, #tpu.memory_space<vmem>>, vector<8x8xf32>,
    return
  }
  func.func @transform_0(%arg0: i32) -> (i32, i32) {
    %c0_i32 = arith.constant 0 : i32
    %c0_i32_0 = arith.constant 0 : i32
    return %arg0, %c0_i32 : i32, i32
  }
  func.func @transform_1(%arg0: i32) -> (i32, i32) {
    %c0_i32 = arith.constant 0 : i32
    %c0_i32_0 = arith.constant 0 : i32
    %c0_i32_1 = arith.constant 0 : i32
    return %c0_i32, %c0_i32_0 : i32, i32
  }
  func.func @transform_2(%arg0: i32) -> (i32, i32) {
    %c0_i32 = arith.constant 0 : i32
    %c0_i32_0 = arith.constant 0 : i32
    %c0_i32_1 = arith.constant 0 : i32
    return %c0_i32, %c0_i32_0 : i32, i32
  }
  func.func @transform_3(%arg0: i32) -> (i32, i32) {
    %c0_i32 = arith.constant 0 : i32
    %c0_i32_0 = arith.constant 0 : i32
    %c0_i32_1 = arith.constant 0 : i32
    return %c0_i32, %c0_i32_0 : i32, i32
  }
  func.func @transform_4(%arg0: i32) -> (i32, i32) {
    %c0_i32 = arith.constant 0 : i32
    %c0_i32_0 = arith.constant 0 : i32
    %c0_i32_1 = arith.constant 0 : i32
    return %c0_i32, %c0_i32_0 : i32, i32
  }
  func.func @transform_5(%arg0: i32) -> (i32, i32) {
    %c0_i32 = arith.constant 0 : i32
    %c0_i32_0 = arith.constant 0 : i32
    %c0_i32_1 = arith.constant 0 : i32
    return %c0_i32, %c0_i32_0 : i32, i32
  }
  func.func @transform_6(%arg0: i32) -> (i32, i32) {
    %c0_i32 = arith.constant 0 : i32
    %c0_i32_0 = arith.constant 0 : i32
    return %arg0, %c0_i32 : i32, i32
  }
}

</mosaic_0001>

<llo_original>
// kernel: sac_critic_forward.1
$region0: #{sac_critic_forward.1}
  #allocation0 [shape = 'u32[]', space=smem, size = 0x4, offset = 0x4, fixed_abs, tag = 'smem constant byte address 0x4 - core index']
  #allocation1 [shape = 'u32[144,128]{1,0:T(1,128)}', space=vmem, size = 0x12000, scoped, tag = 'internal scratch']
  %s0 = inlined_call_operand.vmem [shape: f32[8,5], index: 0, kind: input, shape index: {}]
  %s1 = inlined_call_operand.vmem [shape: f32[5,256], index: 1, kind: input, shape index: {}]
  %s2 = inlined_call_operand.hbm [shape: f32[256,128], index: 2, kind: input, shape index: {}]
  %s3 = inlined_call_operand.vmem [shape: f32[1,128], index: 3, kind: input, shape index: {}]
  %s4 = inlined_call_operand.vmem [shape: f32[128,8], index: 4, kind: input, shape index: {}]
  %s5 = inlined_call_operand.vmem [shape: f32[1,8], index: 5, kind: input, shape index: {}]
  %s6 = inlined_call_operand.vmem [shape: f32[8,8], index: 6, kind: output, shape index: {}]
  %s7 = sld [smem:[#allocation0]]
  $region38: #{sac_critic_forward.1} parent=0
    _
  %s9 = ssub.s32 1, %s7
  %s10 = scalar_select 0, %s9, %s7
  $region1: #{sac_critic_forward.1} parent=0
    #allocation2 [shape = 'u8[131072]{0}', space=vmem, size = 0x20000, scoped, tag = 'input window, operand 2, single buffered']
    #allocation3 [shape = 's32[1]{0}', space=sflag, size = 0x4, scoped, tag = 'scoped memory for sac_critic_forward.1']
    %11 = vsyncpa [#allocation3], 0
    // Predicated region
    $region2: #{sac_critic_forward.1} parent=1 // pred_check
      _
    $region3: #{sac_critic_forward.1} parent=1 // pred_check_branch
      %13 = sbr.rel (0) target = $region5
    $region4: #{sac_critic_forward.1} parent=1 // pred_region
      _
    $region5: #{sac_critic_forward.1} parent=1 // pred_fallthru
      _
    // Predicated region
    $region6: #{sac_critic_forward.1} parent=1 // pred_check
      _
    $region7: #{sac_critic_forward.1} parent=1 // pred_check_branch
      %15 = sbr.rel (0) target = $region9
    $region8: #{sac_critic_forward.1} parent=1 // pred_region
      _
    $region9: #{sac_critic_forward.1} parent=1 // pred_fallthru
      _
    // Predicated region
    $region10: #{sac_critic_forward.1} parent=1 // pred_check
      _
    $region11: #{sac_critic_forward.1} parent=1 // pred_check_branch
      %17 = sbr.rel (0) target = $region13
    $region12: #{sac_critic_forward.1} parent=1 // pred_region
      %s19 = ssub.s32 4096, 4096
      %20 = vsyncadd [#allocation3], %s19
      %s21 = sshll.u32 [#allocation2], 4
      %s22 = int_to_ptr.vmem [resolvable:$true] %s21
      %27 = dma.hbm_to_vmem [thread:$0]  %s2, 4096, %s22, [#allocation3], 128, 128, 8
    $region13: #{sac_critic_forward.1} parent=1 // pred_fallthru
      _
    // Predicated region
    $region14: #{sac_critic_forward.1} parent=1 // pred_check
      _
    $region15: #{sac_critic_forward.1} parent=1 // pred_check_branch
      %29 = sbr.rel (0) target = $region17
    $region16: #{sac_critic_forward.1} parent=1 // pred_region
      _
    $region17: #{sac_critic_forward.1} parent=1 // pred_fallthru
      _
    // Predicated region
    $region18: #{sac_critic_forward.1} parent=1 // pred_check
      _
    $region19: #{sac_critic_forward.1} parent=1 // pred_check_branch
      %31 = sbr.rel (0) target = $region21
    $region20: #{sac_critic_forward.1} parent=1 // pred_region
      _
    $region21: #{sac_critic_forward.1} parent=1 // pred_fallthru
      _
    // Predicated region
    $region22: #{sac_critic_forward.1} parent=1 // pred_check
      _
    $region23: #{sac_critic_forward.1} parent=1 // pred_check_branch
      %33 = sbr.rel (0) target = $region25
    $region24: #{sac_critic_forward.1} parent=1 // pred_region
      _
    $region25: #{sac_critic_forward.1} parent=1 // pred_fallthru
      _
    // Predicated region
    $region26: #{sac_critic_forward.1} parent=1 // pred_check
      _
    $region27: #{sac_critic_forward.1} parent=1 // pred_check_branch
      %35 = sbr.rel (0) target = $region29
    $region28: #{sac_critic_forward.1} parent=1 // pred_region
      %36 = dma.done [#allocation3], 4096
    $region29: #{sac_critic_forward.1} parent=1 // pred_fallthru
      _
    %v37 = vld [vmem:[%s0] sm:$0xff]
    %v38 = vld [vmem:[%s1] sm:$0x1f]
    %v39 = vld [vmem:[%s1 + $0x8] sm:$0x1f]
    %vm40 = vcmask 39936
    %v42 = vsel %vm40, %v37, 0
    %vm44 = vcmask 1044480
    %v46 = vsel %vm44, %v38, 0
    %v49 = vsel %vm44, %v39, 0
    %51 = vmatprep.subr.mxu0 %v49
    %52 = vmatpush1.msra.mxu0 %v46
    %53 = vmatprep.subr.mxu0 0.0
    %54 = vmatpush1.msra.mxu0 0.0
    %55 = vmatprep.subr.mxu0 0.0
    %56 = vmatpush1.msra.mxu0 0.0
    %57 = vmatprep.subr.mxu0 0.0
    %58 = vmatpush1.msra.mxu0 0.0
    %59 = vmatprep.subr.mxu0 0.0
    %60 = vmatpush1.msra.mxu0 0.0
    %61 = vmatprep.subr.mxu0 0.0
    %62 = vmatpush1.msra.mxu0 0.0
    %63 = vmatprep.subr.mxu0 0.0
    %64 = vmatpush1.msra.mxu0 0.0
    %65 = vmatprep.subr.mxu0 0.0
    %66 = vmatpush1.msra.mxu0 0.0
    %67 = vmatprep.subr.mxu0 0.0
    %68 = vmatpush1.msra.mxu0 0.0
    %69 = vmatprep.subr.mxu0 0.0
    %70 = vmatpush1.msra.mxu0 0.0
    %71 = vmatprep.subr.mxu0 0.0
    %72 = vmatpush1.msra.mxu0 0.0
    %73 = vmatprep.subr.mxu0 0.0
    %74 = vmatpush1.msra.mxu0 0.0
    %75 = vmatprep.subr.mxu0 0.0
    %76 = vmatpush1.msra.mxu0 0.0
    %77 = vmatprep.subr.mxu0 0.0
    %78 = vmatpush1.msra.mxu0 0.0
    %79 = vmatprep.subr.mxu0 0.0
    %80 = vmatpush1.msra.mxu0 0.0
    %81 = vmatprep.subr.mxu0 0.0
    %82 = vmatpush1.msra.mxu0 0.0
    %83 = vmatprep.subr.mxu0 0.0
    %84 = vmatpush1.msra.mxu0 0.0
    %85 = vmatprep.subr.mxu0 0.0
    %86 = vmatpush1.msra.mxu0 0.0
    %87 = vmatprep.subr.mxu0 0.0
    %88 = vmatpush1.msra.mxu0 0.0
    %89 = vmatprep.subr.mxu0 0.0
    %90 = vmatpush1.msra.mxu0 0.0
    %91 = vmatprep.subr.mxu0 0.0
    %92 = vmatpush1.msra.mxu0 0.0
    %93 = vmatprep.subr.mxu0 0.0
    %94 = vmatpush1.msra.mxu0 0.0
    %95 = vmatprep.subr.mxu0 0.0
    %96 = vmatpush1.msra.mxu0 0.0
    %97 = vmatprep.subr.mxu0 0.0
    %98 = vmatpush1.msra.mxu0 0.0
    %99 = vmatprep.subr.mxu0 0.0
    %100 = vmatpush1.msra.mxu0 0.0
    %101 = vmatprep.subr.mxu0 0.0
    %102 = vmatpush1.msra.mxu0 0.0
    %103 = vmatprep.subr.mxu0 0.0
    %104 = vmatpush1.msra.mxu0 0.0
    %105 = vmatprep.subr.mxu0 0.0
    %106 = vmatpush1.msra.mxu0 0.0
    %107 = vmatprep.subr.mxu0 0.0
    %108 = vmatpush1.msra.mxu0 0.0
    %109 = vmatprep.subr.mxu0 0.0
    %110 = vmatpush1.msra.mxu0 0.0
    %111 = vmatprep.subr.mxu0 0.0
    %112 = vmatpush1.msra.mxu0 0.0
    %113 = vmatprep.subr.mxu0 0.0
    %114 = vmatpush1.msra.mxu0 0.0
    %115 = vmatprep.mubr.f32.mxu0 0.0
    %116 = vmatmul.mubr.f32.gmra.mrb[0].mxu0 %v42
    %v117 = vpop.f32.mrb[0].mxu0
    %v118 = vadd.f32 0.0, %v117
    %v119 = vpop.f32.mrb[0].mxu0
    %v120 = vadd.f32 0.0, %v119
    %121 = vdwg.mxu0
    %v122 = vmax.f32 %v118, 0.0
    %v123 = vmax.f32 %v120, 0.0
    %v124 = vld [vmem:[#allocation2] sm:$0xff]
    %v125 = vld [vmem:[#allocation2 + $0x8] sm:$0xff]
    %v126 = vld [vmem:[#allocation2 + $0x10] sm:$0xff]
    %v127 = vld [vmem:[#allocation2 + $0x18] sm:$0xff]
    %v128 = vld [vmem:[#allocation2 + $0x20] sm:$0xff]
    %v129 = vld [vmem:[#allocation2 + $0x28] sm:$0xff]
    %v130 = vld [vmem:[#allocation2 + $0x30] sm:$0xff]
    %v131 = vld [vmem:[#allocation2 + $0x38] sm:$0xff]
    %v132 = vld [vmem:[#allocation2 + $0x40] sm:$0xff]
    %v133 = vld [vmem:[#allocation2 + $0x48] sm:$0xff]
    %v134 = vld [vmem:[#allocation2 + $0x50] sm:$0xff]
    %v135 = vld [vmem:[#allocation2 + $0x58] sm:$0xff]
    %v136 = vld [vmem:[#allocation2 + $0x60] sm:$0xff]
    %v137 = vld [vmem:[#allocation2 + $0x68] sm:$0xff]
    %v138 = vld [vmem:[#allocation2 + $0x70] sm:$0xff]
    %v139 = vld [vmem:[#allocation2 + $0x78] sm:$0xff]
    %v140 = vld [vmem:[#allocation2 + $0x80] sm:$0xff]
    %v141 = vld [vmem:[#allocation2 + $0x88] sm:$0xff]
    %v142 = vld [vmem:[#allocation2 + $0x90] sm:$0xff]
    %v143 = vld [vmem:[#allocation2 + $0x98] sm:$0xff]
    %v144 = vld [vmem:[#allocation2 + $0xa0] sm:$0xff]
    %v145 = vld [vmem:[#allocation2 + $0xa8] sm:$0xff]
    %v146 = vld [vmem:[#allocation2 + $0xb0] sm:$0xff]
    %v147 = vld [vmem:[#allocation2 + $0xb8] sm:$0xff]
    %v148 = vld [vmem:[#allocation2 + $0xc0] sm:$0xff]
    %v149 = vld [vmem:[#allocation2 + $0xc8] sm:$0xff]
    %v150 = vld [vmem:[#allocation2 + $0xd0] sm:$0xff]
    %v151 = vld [vmem:[#allocation2 + $0xd8] sm:$0xff]
    %v152 = vld [vmem:[#allocation2 + $0xe0] sm:$0xff]
    %v153 = vld [vmem:[#allocation2 + $0xe8] sm:$0xff]
    %v154 = vld [vmem:[#allocation2 + $0xf0] sm:$0xff]
    %v155 = vld [vmem:[#allocation2 + $0xf8] sm:$0xff]
    %v156 = vld [vmem:[%s3] sm:$0x1]
    %v158 = vlaneseq
    %v159 = vshrl.u32 %v158, 7
    %v160 = vsub.s32 0, %v159
    %v161 = vrot.slane %v156, %v160
    %163 = vmatprep.subr.mxu0 0.0
    %164 = vmatpush1.msra.mxu0 %v124
    %165 = vmatprep.subr.mxu0 0.0
    %166 = vmatpush1.msra.mxu0 %v125
    %167 = vmatprep.subr.mxu0 0.0
    %168 = vmatpush1.msra.mxu0 %v126
    %169 = vmatprep.subr.mxu0 0.0
    %170 = vmatpush1.msra.mxu0 %v127
    %171 = vmatprep.subr.mxu0 0.0
    %172 = vmatpush1.msra.mxu0 %v128
    %173 = vmatprep.subr.mxu0 0.0
    %174 = vmatpush1.msra.mxu0 %v129
    %175 = vmatprep.subr.mxu0 0.0
    %176 = vmatpush1.msra.mxu0 %v130
    %177 = vmatprep.subr.mxu0 0.0
    %178 = vmatpush1.msra.mxu0 %v131
    %179 = vmatprep.subr.mxu0 0.0
    %180 = vmatpush1.msra.mxu0 %v132
    %181 = vmatprep.subr.mxu0 0.0
    %182 = vmatpush1.msra.mxu0 %v133
    %183 = vmatprep.subr.mxu0 0.0
    %184 = vmatpush1.msra.mxu0 %v134
    %185 = vmatprep.subr.mxu0 0.0
    %186 = vmatpush1.msra.mxu0 %v135
    %187 = vmatprep.subr.mxu0 0.0
    %188 = vmatpush1.msra.mxu0 %v136
    %189 = vmatprep.subr.mxu0 0.0
    %190 = vmatpush1.msra.mxu0 %v137
    %191 = vmatprep.subr.mxu0 0.0
    %192 = vmatpush1.msra.mxu0 %v138
    %193 = vmatprep.subr.mxu0 0.0
    %194 = vmatpush1.msra.mxu0 %v139
    %195 = vmatprep.subr.mxu0 0.0
    %196 = vmatpush1.msra.mxu0 %v140
    %197 = vmatprep.subr.mxu0 0.0
    %198 = vmatpush1.msra.mxu0 %v141
    %199 = vmatprep.subr.mxu0 0.0
    %200 = vmatpush1.msra.mxu0 %v142
    %201 = vmatprep.subr.mxu0 0.0
    %202 = vmatpush1.msra.mxu0 %v143
    %203 = vmatprep.subr.mxu0 0.0
    %204 = vmatpush1.msra.mxu0 %v144
    %205 = vmatprep.subr.mxu0 0.0
    %206 = vmatpush1.msra.mxu0 %v145
    %207 = vmatprep.subr.mxu0 0.0
    %208 = vmatpush1.msra.mxu0 %v146
    %209 = vmatprep.subr.mxu0 0.0
    %210 = vmatpush1.msra.mxu0 %v147
    %211 = vmatprep.subr.mxu0 0.0
    %212 = vmatpush1.msra.mxu0 %v148
    %213 = vmatprep.subr.mxu0 0.0
    %214 = vmatpush1.msra.mxu0 %v149
    %215 = vmatprep.subr.mxu0 0.0
    %216 = vmatpush1.msra.mxu0 %v150
    %217 = vmatprep.subr.mxu0 0.0
    %218 = vmatpush1.msra.mxu0 %v151
    %219 = vmatprep.subr.mxu0 0.0
    %220 = vmatpush1.msra.mxu0 %v152
    %221 = vmatprep.subr.mxu0 0.0
    %222 = vmatpush1.msra.mxu0 %v153
    %223 = vmatprep.subr.mxu0 0.0
    %224 = vmatpush1.msra.mxu0 %v154
    %225 = vmatprep.subr.mxu0 0.0
    %226 = vmatpush1.msra.mxu0 %v155
    %227 = vmatprep.mubr.f32.mxu0 %v123
    %228 = vmatmul.mubr.f32.gmra.mrb[0].mxu0 %v122
    %v229 = vpop.f32.mrb[0].mxu0
    %v230 = vadd.f32 %v161, %v229
    %v231 = vpop.f32.mrb[0].mxu0
    %232 = vdwg.mxu0
    %v233 = vmax.f32 %v230, 0.0
    %v234 = vld [vmem:[%s4] sm:$0xff]
    %v235 = vld [vmem:[%s4 + $0x8] sm:$0xff]
    %v236 = vld [vmem:[%s4 + $0x10] sm:$0xff]
    %v237 = vld [vmem:[%s4 + $0x18] sm:$0xff]
    %v238 = vld [vmem:[%s4 + $0x20] sm:$0xff]
    %v239 = vld [vmem:[%s4 + $0x28] sm:$0xff]
    %v240 = vld [vmem:[%s4 + $0x30] sm:$0xff]
    %v241 = vld [vmem:[%s4 + $0x38] sm:$0xff]
    %v242 = vld [vmem:[%s4 + $0x40] sm:$0xff]
    %v243 = vld [vmem:[%s4 + $0x48] sm:$0xff]
    %v244 = vld [vmem:[%s4 + $0x50] sm:$0xff]
    %v245 = vld [vmem:[%s4 + $0x58] sm:$0xff]
    %v246 = vld [vmem:[%s4 + $0x60] sm:$0xff]
    %v247 = vld [vmem:[%s4 + $0x68] sm:$0xff]
    %v248 = vld [vmem:[%s4 + $0x70] sm:$0xff]
    %v249 = vld [vmem:[%s4 + $0x78] sm:$0xff]
    %v250 = vld [vmem:[%s5] sm:$0x1]
    %v252 = vlaneseq
    %v253 = vshrl.u32 %v252, 7
    %v254 = vsub.s32 0, %v253
    %v255 = vrot.slane %v250, %v254
    %257 = vmatprep.subr.mxu0 0.0
    %258 = vmatpush1.msra.mxu0 %v234
    %259 = vmatprep.subr.mxu0 0.0
    %260 = vmatpush1.msra.mxu0 %v235
    %261 = vmatprep.subr.mxu0 0.0
    %262 = vmatpush1.msra.mxu0 %v236
    %263 = vmatprep.subr.mxu0 0.0
    %264 = vmatpush1.msra.mxu0 %v237
    %265 = vmatprep.subr.mxu0 0.0
    %266 = vmatpush1.msra.mxu0 %v238
    %267 = vmatprep.subr.mxu0 0.0
    %268 = vmatpush1.msra.mxu0 %v239
    %269 = vmatprep.subr.mxu0 0.0
    %270 = vmatpush1.msra.mxu0 %v240
    %271 = vmatprep.subr.mxu0 0.0
    %272 = vmatpush1.msra.mxu0 %v241
    %273 = vmatprep.subr.mxu0 0.0
    %274 = vmatpush1.msra.mxu0 %v242
    %275 = vmatprep.subr.mxu0 0.0
    %276 = vmatpush1.msra.mxu0 %v243
    %277 = vmatprep.subr.mxu0 0.0
    %278 = vmatpush1.msra.mxu0 %v244
    %279 = vmatprep.subr.mxu0 0.0
    %280 = vmatpush1.msra.mxu0 %v245
    %281 = vmatprep.subr.mxu0 0.0
    %282 = vmatpush1.msra.mxu0 %v246
    %283 = vmatprep.subr.mxu0 0.0
    %284 = vmatpush1.msra.mxu0 %v247
    %285 = vmatprep.subr.mxu0 0.0
    %286 = vmatpush1.msra.mxu0 %v248
    %287 = vmatprep.subr.mxu0 0.0
    %288 = vmatpush1.msra.mxu0 %v249
    %289 = vmatprep.subr.mxu0 0.0
    %290 = vmatpush1.msra.mxu0 0.0
    %291 = vmatprep.subr.mxu0 0.0
    %292 = vmatpush1.msra.mxu0 0.0
    %293 = vmatprep.subr.mxu0 0.0
    %294 = vmatpush1.msra.mxu0 0.0
    %295 = vmatprep.subr.mxu0 0.0
    %296 = vmatpush1.msra.mxu0 0.0
    %297 = vmatprep.subr.mxu0 0.0
    %298 = vmatpush1.msra.mxu0 0.0
    %299 = vmatprep.subr.mxu0 0.0
    %300 = vmatpush1.msra.mxu0 0.0
    %301 = vmatprep.subr.mxu0 0.0
    %302 = vmatpush1.msra.mxu0 0.0
    %303 = vmatprep.subr.mxu0 0.0
    %304 = vmatpush1.msra.mxu0 0.0
    %305 = vmatprep.subr.mxu0 0.0
    %306 = vmatpush1.msra.mxu0 0.0
    %307 = vmatprep.subr.mxu0 0.0
    %308 = vmatpush1.msra.mxu0 0.0
    %309 = vmatprep.subr.mxu0 0.0
    %310 = vmatpush1.msra.mxu0 0.0
    %311 = vmatprep.subr.mxu0 0.0
    %312 = vmatpush1.msra.mxu0 0.0
    %313 = vmatprep.subr.mxu0 0.0
    %314 = vmatpush1.msra.mxu0 0.0
    %315 = vmatprep.subr.mxu0 0.0
    %316 = vmatpush1.msra.mxu0 0.0
    %317 = vmatprep.subr.mxu0 0.0
    %318 = vmatpush1.msra.mxu0 0.0
    %319 = vmatprep.subr.mxu0 0.0
    %320 = vmatpush1.msra.mxu0 0.0
    %321 = vmatprep.mubr.f32.mxu0 0.0
    %322 = vmatmul.mubr.f32.gmra.mrb[0].mxu0 %v233
    %v323 = vpop.f32.mrb[0].mxu0
    %v324 = vadd.f32 %v255, %v323
    %v325 = vpop.f32.mrb[0].mxu0
    %326 = vdwg.mxu0
    %vm327 = vcmask 64512
    %328 = vst.msk [vmem:[%s6] sm:$0xff] %vm327, %v324
    // Predicated region
    $region30: #{sac_critic_forward.1} parent=1 // pred_check
      _
    $region31: #{sac_critic_forward.1} parent=1 // pred_check_branch
      %330 = sbr.rel (0) target = $region33
    $region32: #{sac_critic_forward.1} parent=1 // pred_region
      _
    $region33: #{sac_critic_forward.1} parent=1 // pred_fallthru
      _
    // Predicated region
    $region34: #{sac_critic_forward.1} parent=1 // pred_check
      _
    $region35: #{sac_critic_forward.1} parent=1 // pred_check_branch
      %332 = sbr.rel (0) target = $region37
    $region36: #{sac_critic_forward.1} parent=1 // pred_region
      _
    $region37: #{sac_critic_forward.1} parent=1 // pred_fallthru
      _
    %333 = vsyncpa [#allocation3], 1

</llo_original>
